<compile_context>
chip_gen: v7x
topology: tpu7x:2x2x1
jax: 0.10.0
libtpu: 0.0.40
codegen_flags: <defaults>
</compile_context>

<pallas_src>
import functools

import jax
import jax.numpy as jnp
from jax import lax
from jax.experimental import pallas as pl
from jax.experimental.pallas import tpu as pltpu


# ---------------------------------------------------------------------------
# Pass 1: streaming raw moments  sum(x) (G,1)  and  x @ x^T (G,G)  per group.
# ---------------------------------------------------------------------------
def _moments_kernel(x_ref, pcov_ref, psum_ref):
    """x_ref: (nj_t, G, hw_t).  pcov_ref: (G,G) f32, psum_ref: (G,1) f32.

    Output blocks are indexed by the nj grid axis only, so they stay resident
    in VMEM across the hw ('arbitrary', innermost) axis and act as per-nj-block
    accumulators; nj is 'parallel' (disjoint outputs -> megacore-safe).
    """
    t = pl.program_id(1)

    @pl.when(t == 0)
    def _init():
        pcov_ref[...] = jnp.zeros_like(pcov_ref)
        psum_ref[...] = jnp.zeros_like(psum_ref)

    x = x_ref[...]                                          # (nj, G, hw)
    # One batched MXU contraction per tile (merged reduction, no row unroll):
    #   pc[n, g, k] = sum_h x[n, g, h] * x[n, k, h]
    pc = jnp.einsum("ngh,nkh->ngk", x, x,
                    preferred_element_type=jnp.float32)     # (nj, G, G)
    pcov_ref[...] += jnp.sum(pc, axis=0)

    s = jnp.sum(x, axis=0, dtype=jnp.float32)               # (G, hw)
    psum_ref[...] += jnp.sum(s, axis=-1, keepdims=True)     # (G, 1)


# ---------------------------------------------------------------------------
# Pass 2: whitening  out = wd @ x + b'   (both grid axes 'parallel').
# ---------------------------------------------------------------------------
def _whiten_kernel(x_ref, wd_ref, bp_ref, o_ref, *, nj_tile):
    x = x_ref[...]                                          # (nj, G, hw)
    wd = wd_ref[...].astype(x.dtype)                        # (G, G)
    bp = bp_ref[...]                                        # (G, 1) f32
    # Broadcast the whitening matrix once per grid step and apply it with a
    # single batched MXU matmul (constant code size for any nj_tile); the
    # bias broadcast is likewise a single hoisted add.
    wdb = jnp.broadcast_to(wd[None], (nj_tile,) + wd.shape)
    y = jnp.einsum("ngk,nkh->ngh", wdb, x,
                   preferred_element_type=jnp.float32)      # (nj, G, hw) f32
    o_ref[...] = (y + bp[None]).astype(o_ref.dtype)


# ---------------------------------------------------------------------------
# Tiling helpers.
# ---------------------------------------------------------------------------
def _pick_tile(full, target, quantum):
    """Largest tile <= target that divides `full` and is a multiple of
    `quantum`; falls back to the full extent (always a legal block)."""
    if full <= target:
        return full
    best = None
    d = quantum
    while d <= target:
        if full % d == 0:
            best = d
        d += quantum
    return best if best is not None else full


def _largest_divisor(n, cap):
    for d in range(min(n, cap), 0, -1):
        if n % d == 0:
            return d
    return 1


# ---------------------------------------------------------------------------
# Wrapper: forward pass of BatchFeatureDecorr (fresh running buffers).
# ---------------------------------------------------------------------------
def batch_feature_decorr(x, weight1, bias1, weight2, bias2, *,
                         num_groups=16, eps=1e-5, n_iter=10, affine=True,
                         block_bytes=8 * 1024 * 1024,
                         nj_tile=None, hw_tile=None):
    N, C, H, W = x.shape
    G = num_groups
    c = (C // G) * G
    if c == 0:
        c = C
        G = C
    J = c // G
    NJ = N * J
    HW = H * W
    M = NJ * HW

    # NCHW -> (N*J, G, H*W): a pure reshape, no data movement.
    x_r = x[:, :c].reshape(NJ, G, HW)
    itemsize = x.dtype.itemsize

    # --- VMEM budget, re-derived per chip (v7x: 64 MiB, v5e/v6e: 128 MiB) ---
    try:
        info = pltpu.get_tpu_info()
        vmem_cap = int(getattr(info, "vmem_capacity_bytes", 64 * 1024 * 1024))
    except Exception:
        vmem_cap = 64 * 1024 * 1024
    vmem_budget = (vmem_cap * 3) // 4              # headroom for the compiler
    # Whitening keeps x-in + out double-buffered -> ~4 live blocks + slack.
    block_bytes = max(64 * 1024, min(int(block_bytes), vmem_budget // 5))

    # --- Tile selection: lane-dense hw tiles, nj grows to fill the budget ---
    if hw_tile is None:
        hw_target = max(128, block_bytes // (G * itemsize))
        hw_tile = _pick_tile(HW, hw_target, 128)
    if nj_tile is None:
        row_bytes = G * hw_tile * itemsize
        # Old hard cap of 8 removed; 256 only bounds the in-kernel batched
        # matmul size (code size / compile time), not the block byte budget
        # for large-HW layers (those fill the budget through hw_tile).
        nj_cap = int(max(1, min(256, block_bytes // max(1, row_bytes))))
        nj_tile = _largest_divisor(NJ, nj_cap)
    assert HW % hw_tile == 0 and NJ % nj_tile == 0
    n_nj = NJ // nj_tile
    n_hw = HW // hw_tile
    block_nbytes = nj_tile * G * hw_tile * itemsize
    vmem_limit = int(min(vmem_budget, 5 * block_nbytes + (8 << 20)))

    flops = int(2 * G * G * M)
    x_bytes = int(x_r.size) * itemsize

    # --- Pass 1: raw moments (reads x once) ---------------------------------
    pcov, psum = pl.pallas_call(
        _moments_kernel,
        out_shape=(jax.ShapeDtypeStruct((n_nj, G, G), jnp.float32),
                   jax.ShapeDtypeStruct((n_nj, G, 1), jnp.float32)),
        grid=(n_nj, n_hw),
        in_specs=[pl.BlockSpec((nj_tile, G, hw_tile),
                               lambda i, t: (i, 0, t))],
        out_specs=(pl.BlockSpec((None, G, G), lambda i, t: (i, 0, 0)),
                   pl.BlockSpec((None, G, 1), lambda i, t: (i, 0, 0))),
        compiler_params=pltpu.CompilerParams(
            dimension_semantics=("parallel", "arbitrary"),
            vmem_limit_bytes=vmem_limit),
        cost_estimate=pl.CostEstimate(flops=flops, transcendentals=0,
                                      bytes_accessed=x_bytes),
    )(x_r)

    # --- Finalize (tiny (G,G) math): f32 at HIGHEST precision ---------------
    f32 = jnp.float32
    mm = functools.partial(jnp.matmul, precision=lax.Precision.HIGHEST)
    cov_raw = jnp.sum(pcov, axis=0)                     # (G, G)
    mu = jnp.sum(psum, axis=0) / M                      # (G, 1)
    eye = jnp.eye(G, dtype=f32)
    cov = cov_raw / M - mm(mu, mu.T) + eps * eye
    norm_a = jnp.linalg.norm(cov)
    Y = cov / norm_a
    Z = eye
    for _ in range(n_iter):
        T = 0.5 * (3.0 * eye - mm(Z, Y))
        Y = mm(Y, T)
        Z = mm(T, Z)
    decorr = Z / jnp.sqrt(norm_a)

    if affine:
        w = weight1[:G, :G].astype(f32)
        b = jnp.reshape(bias1[:G], (G, 1)).astype(f32)
    else:
        w = eye
        b = jnp.zeros((G, 1), f32)
    wd = mm(w, decorr)                                  # w @ cov^{-1/2}
    bp = b - mm(wd, mu)                                 # folded bias

    # --- Pass 2: whitening (reads x again, writes out once) -----------------
    whiten = functools.partial(_whiten_kernel, nj_tile=int(nj_tile))
    y_r = pl.pallas_call(
        whiten,
        out_shape=jax.ShapeDtypeStruct((NJ, G, HW), x.dtype),
        grid=(n_nj, n_hw),
        in_specs=[
            pl.BlockSpec((nj_tile, G, hw_tile), lambda i, t: (i, 0, t)),
            pl.BlockSpec((G, G), lambda i, t: (0, 0)),
            pl.BlockSpec((G, 1), lambda i, t: (0, 0)),
        ],
        out_specs=pl.BlockSpec((nj_tile, G, hw_tile), lambda i, t: (i, 0, t)),
        compiler_params=pltpu.CompilerParams(
            dimension_semantics=("parallel", "parallel"),
            vmem_limit_bytes=vmem_limit),
        cost_estimate=pl.CostEstimate(flops=flops, transcendentals=0,
                                      bytes_accessed=2 * x_bytes),
    )(x_r, wd, bp)

    out = y_r.reshape(N, c, H, W)

    if c != C:
        # Leftover channels: plain normalization (elementwise JAX glue).
        x_tail = x[:, c:]
        x_flat = x_tail.reshape(N, -1)
        mean2 = jnp.mean(x_flat)
        var = jnp.var(x_flat, ddof=1)          # torch.var() is unbiased
        x_t = (x_tail - mean2) / jnp.sqrt(var + eps)
        if affine:
            x_t = x_t * weight2 + bias2
        out = jnp.concatenate([out, x_t], axis=1)
    return out


# ---------------------------------------------------------------------------
# Pure-JAX reference mirroring the PyTorch forward (permute-based path).
# ---------------------------------------------------------------------------
def _reference(x, weight1, bias1, weight2, bias2, *,
               num_groups=16, eps=1e-5, n_iter=10):
    N, C, H, W = x.shape
    G = num_groups
    c = (C // G) * G
    if c == 0:
        c, G = C, C
    M = N * (c // G) * H * W
    mm = functools.partial(jnp.matmul, precision=lax.Precision.HIGHEST)
    x1 = (x[:, :c].reshape(N, c // G, G, H, W)
          .transpose(2, 0, 1, 3, 4).reshape(G, M)).astype(jnp.float32)
    mean1 = jnp.mean(x1, axis=-1, keepdims=True)
    xc = x1 - mean1
    cov = mm(xc, xc.T) / M + eps * jnp.eye(G, dtype=jnp.float32)
    normA = jnp.linalg.norm(cov)
    Y = cov / normA
    I = jnp.eye(G, dtype=jnp.float32)
    Z = I
    for _ in range(n_iter):
        T = 0.5 * (3.0 * I - mm(Z, Y))
        Y = mm(Y, T)
        Z = mm(T, Z)
    decorr = Z / jnp.sqrt(normA)
    y1 = mm(mm(weight1[:G, :G].astype(jnp.float32), decorr), xc) + \
        jnp.reshape(bias1[:G], (G, 1))
    out = (y1.reshape(G, N, c // G, H, W)
             .transpose(1, 2, 0, 3, 4).reshape(N, c, H, W))
    if c != C:
        x_tail = x[:, c:]
        x_flat = x_tail.reshape(N, -1)
        mean2 = jnp.mean(x_flat)
        var = jnp.var(x_flat, ddof=1)
        x_t = (x_tail - mean2) / jnp.sqrt(var + eps)
        x_t = x_t * weight2 + bias2
        out = jnp.concatenate([out, x_t], axis=1)
    return out.astype(x.dtype)


if __name__ == "__main__":
    key = jax.random.PRNGKey(0)
    kw, kb, kx = jax.random.split(key, 3)

    G = 16
    # Non-trivial affine parameters to exercise the wd / folded-bias math.
    weight1 = jnp.eye(G, dtype=jnp.float32) + 0.05 * jax.random.normal(
        kw, (G, G), jnp.float32)
    bias1 = 0.1 * jax.random.normal(kb, (G, 1), jnp.float32)
    weight2 = jnp.array([1.25], jnp.float32)
    bias2 = jnp.array([-0.5], jnp.float32)

    tests = [
        # (name, (N, C, H, W), mean shift, tiling overrides)
        ("single-block",        (2, 32, 8, 8),   0.0, {}),
        ("nj-tiled",            (2, 32, 8, 8),   0.0, dict(nj_tile=1)),
        ("hw+nj-tiled shifted", (2, 32, 16, 16), 3.0, dict(nj_tile=1,
                                                           hw_tile=128)),
        ("tail channels",       (2, 36, 8, 8),   0.0, {}),
    ]
    for idx, (name, shape, shift, kwargs) in enumerate(tests):
        x = jax.random.normal(jax.random.fold_in(kx, idx), shape,
                              jnp.float32) + shift
        out = batch_feature_decorr(x, weight1, bias1, weight2, bias2,
                                   num_groups=G, eps=1e-5, n_iter=10,
                                   affine=True, **kwargs)
        out = jax.block_until_ready(out)
        ref = _reference(x, weight1, bias1, weight2, bias2,
                         num_groups=G, eps=1e-5, n_iter=10)
        assert out.shape == shape, (name, out.shape)
        max_err = float(jnp.max(jnp.abs(out - ref)))
        assert jnp.allclose(out, ref, rtol=2e-3, atol=2e-3), (name, max_err)

    print("KERNEL_OK")
</pallas_src>

<mosaic_0001>
module attributes {stable_mosaic.version = 11 : i64} {
  func.func @_moments_kernel(%arg0: i32, %arg1: i32, %arg2: memref<4x16x64xf32, #tpu.memory_space<vmem>>, %arg3: memref<1x16x16xf32, #tpu.memory_space<vmem>>, %arg4: memref<1x16x1xf32, #tpu.memory_space<vmem>>) attributes {dimension_semantics = [#tpu.dimension_semantics<parallel>, #tpu.dimension_semantics<arbitrary>], iteration_bounds = array<i64: 1, 1>, scalar_prefetch = 0 : i64, scratch_operands = 0 : i64, tpu.core_type = #tpu.core_type<tc>, window_params = [{transform_indices = @transform_0, window_bounds = array<i64: 4, 16, 64>}, {transform_indices = @transform_1, window_bounds = array<i64: 1, 16, 16>}, {transform_indices = @transform_2, window_bounds = array<i64: 1, 16, 1>}]} {
    %c0_i32 = arith.constant 0 : i32
    %0 = arith.cmpi eq, %arg1, %c0_i32 : i32
    %1 = arith.extui %0 : i1 to i32
    %c0_i32_0 = arith.constant 0 : i32
    %2 = arith.cmpi ne, %1, %c0_i32_0 : i32
    scf.if %2 {
      %cst_18 = arith.constant 0.000000e+00 : f32
      %21 = vector.broadcast %cst_18 : f32 to vector<16x16xf32>
      %c0_19 = arith.constant 0 : index
      %c0_20 = arith.constant 0 : index
      %c0_21 = arith.constant 0 : index
      %22 = vector.load %arg3[%c0_19, %c0_20, %c0_21] : memref<1x16x16xf32, #tpu.memory_space<vmem>>, vector<1x16x16xf32>
      %23 = vector.shape_cast %22 : vector<1x16x16xf32> to vector<16x16xf32>
      %24 = vector.shape_cast %21 : vector<16x16xf32> to vector<1x16x16xf32>
      tpu.vector_store %arg3[%c0_19, %c0_20, %c0_21], %24 {strides = array<i32>} : memref<1x16x16xf32, #tpu.memory_space<vmem>>, vector<1x16x16xf32>,
      %cst_22 = arith.constant 0.000000e+00 : f32
      %25 = vector.broadcast %cst_22 : f32 to vector<16x1xf32>
      %c0_23 = arith.constant 0 : index
      %c0_24 = arith.constant 0 : index
      %c0_25 = arith.constant 0 : index
      %26 = vector.load %arg4[%c0_23, %c0_24, %c0_25] : memref<1x16x1xf32, #tpu.memory_space<vmem>>, vector<1x16x1xf32>
      %27 = vector.shape_cast %26 : vector<1x16x1xf32> to vector<16x1xf32>
      %28 = vector.shape_cast %25 : vector<16x1xf32> to vector<1x16x1xf32>
      tpu.vector_store %arg4[%c0_23, %c0_24, %c0_25], %28 {strides = array<i32>} : memref<1x16x1xf32, #tpu.memory_space<vmem>>, vector<1x16x1xf32>,
    } else {
    }
    %c0 = arith.constant 0 : index
    %c0_1 = arith.constant 0 : index
    %c0_2 = arith.constant 0 : index
    %3 = vector.load %arg2[%c0, %c0_1, %c0_2] : memref<4x16x64xf32, #tpu.memory_space<vmem>>, vector<4x16x64xf32>
    "tpu.trace_start"() <{level = 10 : i32, message = "ngh,nkh->ngk"}> : () -> ()
    %cst = arith.constant dense<0.000000e+00> : vector<4x16x16xf32>
    %4 = tpu.matmul %3, %3, %cst {dimension_numbers = #tpu.dot_dimension_numbers<[2], [2], [1], [1], [0, 0, 0, 1, 1, 1], [0], [0]>} : vector<4x16x64xf32>, vector<4x16x64xf32>, vector<4x16x16xf32> -> vector<4x16x16xf32>
    "tpu.trace_stop"() : () -> ()
    %c0_3 = arith.constant 0 : index
    %c0_4 = arith.constant 0 : index
    %c0_5 = arith.constant 0 : index
    %5 = vector.load %arg3[%c0_3, %c0_4, %c0_5] : memref<1x16x16xf32, #tpu.memory_space<vmem>>, vector<1x16x16xf32>
    %6 = vector.shape_cast %5 : vector<1x16x16xf32> to vector<16x16xf32>
    %cst_6 = arith.constant dense<0.000000e+00> : vector<16x16xf32>
    %7 = vector.multi_reduction <add>, %4, %cst_6 [0] : vector<4x16x16xf32> to vector<16x16xf32>
    %8 = arith.addf %6, %7 : vector<16x16xf32>
    %c0_7 = arith.constant 0 : index
    %c0_8 = arith.constant 0 : index
    %c0_9 = arith.constant 0 : index
    %9 = vector.load %arg3[%c0_7, %c0_8, %c0_9] : memref<1x16x16xf32, #tpu.memory_space<vmem>>, vector<1x16x16xf32>
    %10 = vector.shape_cast %9 : vector<1x16x16xf32> to vector<16x16xf32>
    %11 = vector.shape_cast %8 : vector<16x16xf32> to vector<1x16x16xf32>
    tpu.vector_store %arg3[%c0_7, %c0_8, %c0_9], %11 {strides = array<i32>} : memref<1x16x16xf32, #tpu.memory_space<vmem>>, vector<1x16x16xf32>,
    %cst_10 = arith.constant dense<0.000000e+00> : vector<16x64xf32>
    %12 = vector.multi_reduction <add>, %3, %cst_10 [0] : vector<4x16x64xf32> to vector<16x64xf32>
    %c0_11 = arith.constant 0 : index
    %c0_12 = arith.constant 0 : index
    %c0_13 = arith.constant 0 : index
    %13 = vector.load %arg4[%c0_11, %c0_12, %c0_13] : memref<1x16x1xf32, #tpu.memory_space<vmem>>, vector<1x16x1xf32>
    %14 = vector.shape_cast %13 : vector<1x16x1xf32> to vector<16x1xf32>
    %cst_14 = arith.constant dense<0.000000e+00> : vector<16xf32>
    %15 = vector.multi_reduction <add>, %12, %cst_14 [1] : vector<16x64xf32> to vector<16xf32>
    %16 = vector.shape_cast %15 : vector<16xf32> to vector<16x1xf32>
    %17 = arith.addf %14, %16 : vector<16x1xf32>
    %c0_15 = arith.constant 0 : index
    %c0_16 = arith.constant 0 : index
    %c0_17 = arith.constant 0 : index
    %18 = vector.load %arg4[%c0_15, %c0_16, %c0_17] : memref<1x16x1xf32, #tpu.memory_space<vmem>>, vector<1x16x1xf32>
    %19 = vector.shape_cast %18 : vector<1x16x1xf32> to vector<16x1xf32>
    %20 = vector.shape_cast %17 : vector<16x1xf32> to vector<1x16x1xf32>
    tpu.vector_store %arg4[%c0_15, %c0_16, %c0_17], %20 {strides = array<i32>} : memref<1x16x1xf32, #tpu.memory_space<vmem>>, vector<1x16x1xf32>,
    return
  }
  func.func @transform_0(%arg0: i32, %arg1: i32) -> (i32, i32, i32) {
    %c0_i32 = arith.constant 0 : i32
    %c0_i32_0 = arith.constant 0 : i32
    return %arg0, %c0_i32, %arg1 : i32, i32, i32
  }
  func.func @transform_1(%arg0: i32, %arg1: i32) -> (i32, i32, i32) {
    %c0_i32 = arith.constant 0 : i32
    %c0_i32_0 = arith.constant 0 : i32
    %c0_i32_1 = arith.constant 0 : i32
    return %arg0, %c0_i32, %c0_i32_0 : i32, i32, i32
  }
  func.func @transform_2(%arg0: i32, %arg1: i32) -> (i32, i32, i32) {
    %c0_i32 = arith.constant 0 : i32
    %c0_i32_0 = arith.constant 0 : i32
    %c0_i32_1 = arith.constant 0 : i32
    return %arg0, %c0_i32, %c0_i32_0 : i32, i32, i32
  }
}

</mosaic_0001>

<llo_original>
// kernel: tpu_custom_call.1
$region0: #{tpu_custom_call.1}
  #allocation0 [shape = 'u32[]', space=smem, size = 0x4, offset = 0x4, fixed_abs, tag = 'smem constant byte address 0x4 - core index']
  #allocation1 [shape = 'u32[144,128]{1,0:T(1,128)}', space=vmem, size = 0x12000, scoped, tag = 'internal scratch']
  %s0 = inlined_call_operand.hbm [shape: f32[4,16,64], index: 0, kind: input, shape index: {}]
  %s1 = inlined_call_operand.hbm [shape: f32[1,16,16], index: 1, kind: output, shape index: {0}]
  %s2 = inlined_call_operand.vmem [shape: f32[1,16,1], index: 2, kind: output, shape index: {1}]
  %3 = xla_tuple %s1, %s2
  %s4 = sld [smem:[#allocation0]]
  $region30: #{tpu_custom_call.1} parent=0
    _
  %s6 = ssub.s32 1, %s4
  %s7 = scalar_select 0, %s6, %s4
  $region1: #{tpu_custom_call.1} parent=0
    #allocation2 [shape = 'u8[32768]{0}', space=vmem, size = 0x8000, scoped, tag = 'input window, operand 0, single buffered']
    #allocation3 [shape = 's32[1]{0}', space=sflag, size = 0x4, scoped, tag = 'scoped memory for tpu_custom_call.1']
    #allocation4 [shape = 's32[1]{0}', space=sflag, size = 0x4, scoped, tag = 'scoped memory for tpu_custom_call.1']
    #allocation5 [shape = 'u8[8192]{0}', space=vmem, size = 0x2000, scoped, tag = 'output window, operand 0, single buffered']
    %8 = vsyncpa [#allocation3], 0
    %9 = vsyncpa [#allocation4], 0
    // Predicated region
    $region2: #{tpu_custom_call.1} parent=1 // pred_check
      _
    $region3: #{tpu_custom_call.1} parent=1 // pred_check_branch
      %11 = sbr.rel (0) target = $region5
    $region4: #{tpu_custom_call.1} parent=1 // pred_region
      %s13 = ssub.s32 1024, 1024
      %14 = vsyncadd [#allocation3], %s13
      %s15 = sshll.u32 [#allocation2], 4
      %s16 = int_to_ptr.vmem [resolvable:$true] %s15
      %21 = dma.hbm_to_vmem [thread:$0]  %s0, 1024, %s16, [#allocation3], 128, 128, 8
    $region5: #{tpu_custom_call.1} parent=1 // pred_fallthru
      _
    // Predicated region
    $region6: #{tpu_custom_call.1} parent=1 // pred_check
      _
    $region7: #{tpu_custom_call.1} parent=1 // pred_check_branch
      %23 = sbr.rel (0) target = $region9
    $region8: #{tpu_custom_call.1} parent=1 // pred_region
      %24 = dma.done [#allocation3], 1024
    $region9: #{tpu_custom_call.1} parent=1 // pred_fallthru
      _
    %p25 = scmp.eq.s32.totalorder 0, 0
    // Predicated region
    $region10: #{tpu_custom_call.1} parent=1 // pred_check
      %p26 = pneg %p25
    $region11: #{tpu_custom_call.1} parent=1 // pred_check_branch
      %28 = sbr.rel (%p26) target = $region13
    $region12: #{tpu_custom_call.1} parent=1 // pred_region
      %vm29 = vcmask 130048
      %30 = vst.msk [vmem:[#allocation5] sm:$0xff] %vm29, 0.0
      %31 = vst.msk [vmem:[#allocation5 + $0x8] sm:$0xff] %vm29, 0.0
      %vm32 = vcmask 7168
      %33 = vst.msk [vmem:[%s2] sm:$0xff] %vm32, 0.0
      %34 = vst.msk [vmem:[%s2 + $0x8] sm:$0xff] %vm32, 0.0
    $region13: #{tpu_custom_call.1} parent=1 // pred_fallthru
      _
    %v35 = vld [vmem:[#allocation2] sm:$0xff]
    %v36 = vld [vmem:[#allocation2 + $0x8] sm:$0xff]
    %v37 = vld [vmem:[#allocation2 + $0x10] sm:$0xff]
    %v38 = vld [vmem:[#allocation2 + $0x18] sm:$0xff]
    %v39 = vld [vmem:[#allocation2 + $0x20] sm:$0xff]
    %v40 = vld [vmem:[#allocation2 + $0x28] sm:$0xff]
    %v41 = vld [vmem:[#allocation2 + $0x30] sm:$0xff]
    %v42 = vld [vmem:[#allocation2 + $0x38] sm:$0xff]
    %vm43 = vcmask 523264
    %v45 = vsel %vm43, %v35, 0
    %v48 = vsel %vm43, %v36, 0
    %50 = vmatprep.subr.mxu0 0.0
    %51 = vmatpush1.xpose.msra.mxu0 %v45
    %52 = vmatprep.subr.mxu0 0.0
    %53 = vmatpush1.xpose.msra.mxu0 %v48
    %54 = vmatprep.subr.mxu0 0.0
    %55 = vmatpush1.xpose.msra.mxu0 0.0
    %56 = vmatprep.subr.mxu0 0.0
    %57 = vmatpush1.xpose.msra.mxu0 0.0
    %58 = vmatprep.subr.mxu0 0.0
    %59 = vmatpush1.xpose.msra.mxu0 0.0
    %60 = vmatprep.subr.mxu0 0.0
    %61 = vmatpush1.xpose.msra.mxu0 0.0
    %62 = vmatprep.subr.mxu0 0.0
    %63 = vmatpush1.xpose.msra.mxu0 0.0
    %64 = vmatprep.subr.mxu0 0.0
    %65 = vmatpush1.xpose.msra.mxu0 0.0
    %66 = vmatprep.subr.mxu0 0.0
    %67 = vmatpush1.xpose.msra.mxu0 0.0
    %68 = vmatprep.subr.mxu0 0.0
    %69 = vmatpush1.xpose.msra.mxu0 0.0
    %70 = vmatprep.subr.mxu0 0.0
    %71 = vmatpush1.xpose.msra.mxu0 0.0
    %72 = vmatprep.subr.mxu0 0.0
    %73 = vmatpush1.xpose.msra.mxu0 0.0
    %74 = vmatprep.subr.mxu0 0.0
    %75 = vmatpush1.xpose.msra.mxu0 0.0
    %76 = vmatprep.subr.mxu0 0.0
    %77 = vmatpush1.xpose.msra.mxu0 0.0
    %78 = vmatprep.subr.mxu0 0.0
    %79 = vmatpush1.xpose.msra.mxu0 0.0
    %80 = vmatprep.subr.mxu0 0.0
    %81 = vmatpush1.xpose.msra.mxu0 0.0
    %82 = vmatprep.subr.mxu0 0.0
    %83 = vmatpush1.xpose.msra.mxu0 0.0
    %84 = vmatprep.subr.mxu0 0.0
    %85 = vmatpush1.xpose.msra.mxu0 0.0
    %86 = vmatprep.subr.mxu0 0.0
    %87 = vmatpush1.xpose.msra.mxu0 0.0
    %88 = vmatprep.subr.mxu0 0.0
    %89 = vmatpush1.xpose.msra.mxu0 0.0
    %90 = vmatprep.subr.mxu0 0.0
    %91 = vmatpush1.xpose.msra.mxu0 0.0
    %92 = vmatprep.subr.mxu0 0.0
    %93 = vmatpush1.xpose.msra.mxu0 0.0
    %94 = vmatprep.subr.mxu0 0.0
    %95 = vmatpush1.xpose.msra.mxu0 0.0
    %96 = vmatprep.subr.mxu0 0.0
    %97 = vmatpush1.xpose.msra.mxu0 0.0
    %98 = vmatprep.subr.mxu0 0.0
    %99 = vmatpush1.xpose.msra.mxu0 0.0
    %100 = vmatprep.subr.mxu0 0.0
    %101 = vmatpush1.xpose.msra.mxu0 0.0
    %102 = vmatprep.subr.mxu0 0.0
    %103 = vmatpush1.xpose.msra.mxu0 0.0
    %104 = vmatprep.subr.mxu0 0.0
    %105 = vmatpush1.xpose.msra.mxu0 0.0
    %106 = vmatprep.subr.mxu0 0.0
    %107 = vmatpush1.xpose.msra.mxu0 0.0
    %108 = vmatprep.subr.mxu0 0.0
    %109 = vmatpush1.xpose.msra.mxu0 0.0
    %110 = vmatprep.subr.mxu0 0.0
    %111 = vmatpush1.xpose.msra.mxu0 0.0
    %112 = vmatprep.subr.mxu0 0.0
    %113 = vmatpush1.xpose.msra.mxu0 0.0
    %114 = vmatprep.mubr.f32.mxu0 0.0
    %115 = vmatmul.mubr.f32.gmra.mrb[0].mxu0 %v45
    %v116 = vpop.f32.mrb[0].mxu0
    %v117 = vadd.f32 0.0, %v116
    %v118 = vpop.f32.mrb[0].mxu0
    %119 = vmatprep.mubr.f32.mxu0 0.0
    %120 = vmatmul.mubr.f32.gmra.mrb[0].mxu0 %v48
    %v121 = vpop.f32.mrb[0].mxu0
    %v122 = vadd.f32 0.0, %v121
    %v123 = vpop.f32.mrb[0].mxu0
    %124 = vdwg.mxu0
    %v126 = vsel %vm43, %v37, 0
    %v129 = vsel %vm43, %v38, 0
    %131 = vmatprep.subr.mxu0 0.0
    %132 = vmatpush1.xpose.msra.mxu0 %v126
    %133 = vmatprep.subr.mxu0 0.0
    %134 = vmatpush1.xpose.msra.mxu0 %v129
    %135 = vmatprep.subr.mxu0 0.0
    %136 = vmatpush1.xpose.msra.mxu0 0.0
    %137 = vmatprep.subr.mxu0 0.0
    %138 = vmatpush1.xpose.msra.mxu0 0.0
    %139 = vmatprep.subr.mxu0 0.0
    %140 = vmatpush1.xpose.msra.mxu0 0.0
    %141 = vmatprep.subr.mxu0 0.0
    %142 = vmatpush1.xpose.msra.mxu0 0.0
    %143 = vmatprep.subr.mxu0 0.0
    %144 = vmatpush1.xpose.msra.mxu0 0.0
    %145 = vmatprep.subr.mxu0 0.0
    %146 = vmatpush1.xpose.msra.mxu0 0.0
    %147 = vmatprep.subr.mxu0 0.0
    %148 = vmatpush1.xpose.msra.mxu0 0.0
    %149 = vmatprep.subr.mxu0 0.0
    %150 = vmatpush1.xpose.msra.mxu0 0.0
    %151 = vmatprep.subr.mxu0 0.0
    %152 = vmatpush1.xpose.msra.mxu0 0.0
    %153 = vmatprep.subr.mxu0 0.0
    %154 = vmatpush1.xpose.msra.mxu0 0.0
    %155 = vmatprep.subr.mxu0 0.0
    %156 = vmatpush1.xpose.msra.mxu0 0.0
    %157 = vmatprep.subr.mxu0 0.0
    %158 = vmatpush1.xpose.msra.mxu0 0.0
    %159 = vmatprep.subr.mxu0 0.0
    %160 = vmatpush1.xpose.msra.mxu0 0.0
    %161 = vmatprep.subr.mxu0 0.0
    %162 = vmatpush1.xpose.msra.mxu0 0.0
    %163 = vmatprep.subr.mxu0 0.0
    %164 = vmatpush1.xpose.msra.mxu0 0.0
    %165 = vmatprep.subr.mxu0 0.0
    %166 = vmatpush1.xpose.msra.mxu0 0.0
    %167 = vmatprep.subr.mxu0 0.0
    %168 = vmatpush1.xpose.msra.mxu0 0.0
    %169 = vmatprep.subr.mxu0 0.0
    %170 = vmatpush1.xpose.msra.mxu0 0.0
    %171 = vmatprep.subr.mxu0 0.0
    %172 = vmatpush1.xpose.msra.mxu0 0.0
    %173 = vmatprep.subr.mxu0 0.0
    %174 = vmatpush1.xpose.msra.mxu0 0.0
    %175 = vmatprep.subr.mxu0 0.0
    %176 = vmatpush1.xpose.msra.mxu0 0.0
    %177 = vmatprep.subr.mxu0 0.0
    %178 = vmatpush1.xpose.msra.mxu0 0.0
    %179 = vmatprep.subr.mxu0 0.0
    %180 = vmatpush1.xpose.msra.mxu0 0.0
    %181 = vmatprep.subr.mxu0 0.0
    %182 = vmatpush1.xpose.msra.mxu0 0.0
    %183 = vmatprep.subr.mxu0 0.0
    %184 = vmatpush1.xpose.msra.mxu0 0.0
    %185 = vmatprep.subr.mxu0 0.0
    %186 = vmatpush1.xpose.msra.mxu0 0.0
    %187 = vmatprep.subr.mxu0 0.0
    %188 = vmatpush1.xpose.msra.mxu0 0.0
    %189 = vmatprep.subr.mxu0 0.0
    %190 = vmatpush1.xpose.msra.mxu0 0.0
    %191 = vmatprep.subr.mxu0 0.0
    %192 = vmatpush1.xpose.msra.mxu0 0.0
    %193 = vmatprep.subr.mxu0 0.0
    %194 = vmatpush1.xpose.msra.mxu0 0.0
    %195 = vmatprep.mubr.f32.mxu0 0.0
    %196 = vmatmul.mubr.f32.gmra.mrb[0].mxu0 %v126
    %v197 = vpop.f32.mrb[0].mxu0
    %v198 = vadd.f32 0.0, %v197
    %v199 = vpop.f32.mrb[0].mxu0
    %200 = vmatprep.mubr.f32.mxu0 0.0
    %201 = vmatmul.mubr.f32.gmra.mrb[0].mxu0 %v129
    %v202 = vpop.f32.mrb[0].mxu0
    %v203 = vadd.f32 0.0, %v202
    %v204 = vpop.f32.mrb[0].mxu0
    %205 = vdwg.mxu0
    %v207 = vsel %vm43, %v39, 0
    %v210 = vsel %vm43, %v40, 0
    %212 = vmatprep.subr.mxu0 0.0
    %213 = vmatpush1.xpose.msra.mxu0 %v207
    %214 = vmatprep.subr.mxu0 0.0
    %215 = vmatpush1.xpose.msra.mxu0 %v210
    %216 = vmatprep.subr.mxu0 0.0
    %217 = vmatpush1.xpose.msra.mxu0 0.0
    %218 = vmatprep.subr.mxu0 0.0
    %219 = vmatpush1.xpose.msra.mxu0 0.0
    %220 = vmatprep.subr.mxu0 0.0
    %221 = vmatpush1.xpose.msra.mxu0 0.0
    %222 = vmatprep.subr.mxu0 0.0
    %223 = vmatpush1.xpose.msra.mxu0 0.0
    %224 = vmatprep.subr.mxu0 0.0
    %225 = vmatpush1.xpose.msra.mxu0 0.0
    %226 = vmatprep.subr.mxu0 0.0
    %227 = vmatpush1.xpose.msra.mxu0 0.0
    %228 = vmatprep.subr.mxu0 0.0
    %229 = vmatpush1.xpose.msra.mxu0 0.0
    %230 = vmatprep.subr.mxu0 0.0
    %231 = vmatpush1.xpose.msra.mxu0 0.0
    %232 = vmatprep.subr.mxu0 0.0
    %233 = vmatpush1.xpose.msra.mxu0 0.0
    %234 = vmatprep.subr.mxu0 0.0
    %235 = vmatpush1.xpose.msra.mxu0 0.0
    %236 = vmatprep.subr.mxu0 0.0
    %237 = vmatpush1.xpose.msra.mxu0 0.0
    %238 = vmatprep.subr.mxu0 0.0
    %239 = vmatpush1.xpose.msra.mxu0 0.0
    %240 = vmatprep.subr.mxu0 0.0
    %241 = vmatpush1.xpose.msra.mxu0 0.0
    %242 = vmatprep.subr.mxu0 0.0
    %243 = vmatpush1.xpose.msra.mxu0 0.0
    %244 = vmatprep.subr.mxu0 0.0
    %245 = vmatpush1.xpose.msra.mxu0 0.0
    %246 = vmatprep.subr.mxu0 0.0
    %247 = vmatpush1.xpose.msra.mxu0 0.0
    %248 = vmatprep.subr.mxu0 0.0
    %249 = vmatpush1.xpose.msra.mxu0 0.0
    %250 = vmatprep.subr.mxu0 0.0
    %251 = vmatpush1.xpose.msra.mxu0 0.0
    %252 = vmatprep.subr.mxu0 0.0
    %253 = vmatpush1.xpose.msra.mxu0 0.0
    %254 = vmatprep.subr.mxu0 0.0
    %255 = vmatpush1.xpose.msra.mxu0 0.0
    %256 = vmatprep.subr.mxu0 0.0
    %257 = vmatpush1.xpose.msra.mxu0 0.0
    %258 = vmatprep.subr.mxu0 0.0
    %259 = vmatpush1.xpose.msra.mxu0 0.0
    %260 = vmatprep.subr.mxu0 0.0
    %261 = vmatpush1.xpose.msra.mxu0 0.0
    %262 = vmatprep.subr.mxu0 0.0
    %263 = vmatpush1.xpose.msra.mxu0 0.0
    %264 = vmatprep.subr.mxu0 0.0
    %265 = vmatpush1.xpose.msra.mxu0 0.0
    %266 = vmatprep.subr.mxu0 0.0
    %267 = vmatpush1.xpose.msra.mxu0 0.0
    %268 = vmatprep.subr.mxu0 0.0
    %269 = vmatpush1.xpose.msra.mxu0 0.0
    %270 = vmatprep.subr.mxu0 0.0
    %271 = vmatpush1.xpose.msra.mxu0 0.0
    %272 = vmatprep.subr.mxu0 0.0
    %273 = vmatpush1.xpose.msra.mxu0 0.0
    %274 = vmatprep.subr.mxu0 0.0
    %275 = vmatpush1.xpose.msra.mxu0 0.0
    %276 = vmatprep.mubr.f32.mxu0 0.0
    %277 = vmatmul.mubr.f32.gmra.mrb[0].mxu0 %v207
    %v278 = vpop.f32.mrb[0].mxu0
    %v279 = vadd.f32 0.0, %v278
    %v280 = vpop.f32.mrb[0].mxu0
    %281 = vmatprep.mubr.f32.mxu0 0.0
    %282 = vmatmul.mubr.f32.gmra.mrb[0].mxu0 %v210
    %v283 = vpop.f32.mrb[0].mxu0
    %v284 = vadd.f32 0.0, %v283
    %v285 = vpop.f32.mrb[0].mxu0
    %286 = vdwg.mxu0
    %v288 = vsel %vm43, %v41, 0
    %v291 = vsel %vm43, %v42, 0
    %293 = vmatprep.subr.mxu0 0.0
    %294 = vmatpush1.xpose.msra.mxu0 %v288
    %295 = vmatprep.subr.mxu0 0.0
    %296 = vmatpush1.xpose.msra.mxu0 %v291
    %297 = vmatprep.subr.mxu0 0.0
    %298 = vmatpush1.xpose.msra.mxu0 0.0
    %299 = vmatprep.subr.mxu0 0.0
    %300 = vmatpush1.xpose.msra.mxu0 0.0
    %301 = vmatprep.subr.mxu0 0.0
    %302 = vmatpush1.xpose.msra.mxu0 0.0
    %303 = vmatprep.subr.mxu0 0.0
    %304 = vmatpush1.xpose.msra.mxu0 0.0
    %305 = vmatprep.subr.mxu0 0.0
    %306 = vmatpush1.xpose.msra.mxu0 0.0
    %307 = vmatprep.subr.mxu0 0.0
    %308 = vmatpush1.xpose.msra.mxu0 0.0
    %309 = vmatprep.subr.mxu0 0.0
    %310 = vmatpush1.xpose.msra.mxu0 0.0
    %311 = vmatprep.subr.mxu0 0.0
    %312 = vmatpush1.xpose.msra.mxu0 0.0
    %313 = vmatprep.subr.mxu0 0.0
    %314 = vmatpush1.xpose.msra.mxu0 0.0
    %315 = vmatprep.subr.mxu0 0.0
    %316 = vmatpush1.xpose.msra.mxu0 0.0
    %317 = vmatprep.subr.mxu0 0.0
    %318 = vmatpush1.xpose.msra.mxu0 0.0
    %319 = vmatprep.subr.mxu0 0.0
    %320 = vmatpush1.xpose.msra.mxu0 0.0
    %321 = vmatprep.subr.mxu0 0.0
    %322 = vmatpush1.xpose.msra.mxu0 0.0
    %323 = vmatprep.subr.mxu0 0.0
    %324 = vmatpush1.xpose.msra.mxu0 0.0
    %325 = vmatprep.subr.mxu0 0.0
    %326 = vmatpush1.xpose.msra.mxu0 0.0
    %327 = vmatprep.subr.mxu0 0.0
    %328 = vmatpush1.xpose.msra.mxu0 0.0
    %329 = vmatprep.subr.mxu0 0.0
    %330 = vmatpush1.xpose.msra.mxu0 0.0
    %331 = vmatprep.subr.mxu0 0.0
    %332 = vmatpush1.xpose.msra.mxu0 0.0
    %333 = vmatprep.subr.mxu0 0.0
    %334 = vmatpush1.xpose.msra.mxu0 0.0
    %335 = vmatprep.subr.mxu0 0.0
    %336 = vmatpush1.xpose.msra.mxu0 0.0
    %337 = vmatprep.subr.mxu0 0.0
    %338 = vmatpush1.xpose.msra.mxu0 0.0
    %339 = vmatprep.subr.mxu0 0.0
    %340 = vmatpush1.xpose.msra.mxu0 0.0
    %341 = vmatprep.subr.mxu0 0.0
    %342 = vmatpush1.xpose.msra.mxu0 0.0
    %343 = vmatprep.subr.mxu0 0.0
    %344 = vmatpush1.xpose.msra.mxu0 0.0
    %345 = vmatprep.subr.mxu0 0.0
    %346 = vmatpush1.xpose.msra.mxu0 0.0
    %347 = vmatprep.subr.mxu0 0.0
    %348 = vmatpush1.xpose.msra.mxu0 0.0
    %349 = vmatprep.subr.mxu0 0.0
    %350 = vmatpush1.xpose.msra.mxu0 0.0
    %351 = vmatprep.subr.mxu0 0.0
    %352 = vmatpush1.xpose.msra.mxu0 0.0
    %353 = vmatprep.subr.mxu0 0.0
    %354 = vmatpush1.xpose.msra.mxu0 0.0
    %355 = vmatprep.subr.mxu0 0.0
    %356 = vmatpush1.xpose.msra.mxu0 0.0
    %357 = vmatprep.mubr.f32.mxu0 0.0
    %358 = vmatmul.mubr.f32.gmra.mrb[0].mxu0 %v288
    %v359 = vpop.f32.mrb[0].mxu0
    %v360 = vadd.f32 0.0, %v359
    %v361 = vpop.f32.mrb[0].mxu0
    %362 = vmatprep.mubr.f32.mxu0 0.0
    %363 = vmatmul.mubr.f32.gmra.mrb[0].mxu0 %v291
    %v364 = vpop.f32.mrb[0].mxu0
    %v365 = vadd.f32 0.0, %v364
    %v366 = vpop.f32.mrb[0].mxu0
    %367 = vdwg.mxu0
    %v368 = vld [vmem:[#allocation5] sm:$0xff]
    %v369 = vld [vmem:[#allocation5 + $0x8] sm:$0xff]
    %vm370 = vcmask 130048
    %v371 = vsel %vm370, %v117, 0.0
    %v372 = vsel %vm370, %v198, 0.0
    %v373 = vadd.f32 %v371, %v372
    %v374 = vsel %vm370, %v279, 0.0
    %v375 = vadd.f32 %v373, %v374
    %v376 = vsel %vm370, %v360, 0.0
    %v377 = vadd.f32 %v375, %v376
    %v378 = vsel %vm370, %v122, 0.0
    %v379 = vsel %vm370, %v203, 0.0
    %v380 = vadd.f32 %v378, %v379
    %v381 = vsel %vm370, %v284, 0.0
    %v382 = vadd.f32 %v380, %v381
    %v383 = vsel %vm370, %v365, 0.0
    %v384 = vadd.f32 %v382, %v383
    %v385 = vadd.f32 %v368, %v377
    %v386 = vadd.f32 %v369, %v384
    %387 = vst.msk [vmem:[#allocation5] sm:$0xff] %vm370, %v385
    %388 = vst.msk [vmem:[#allocation5 + $0x8] sm:$0xff] %vm370, %v386
    %v389 = vsel %vm43, %v35, 0.0
    %v390 = vsel %vm43, %v37, 0.0
    %v391 = vadd.f32 %v389, %v390
    %v392 = vsel %vm43, %v39, 0.0
    %v393 = vadd.f32 %v391, %v392
    %v394 = vsel %vm43, %v41, 0.0
    %v395 = vadd.f32 %v393, %v394
    %v396 = vsel %vm43, %v36, 0.0
    %v397 = vsel %vm43, %v38, 0.0
    %v398 = vadd.f32 %v396, %v397
    %v399 = vsel %vm43, %v40, 0.0
    %v400 = vadd.f32 %v398, %v399
    %v401 = vsel %vm43, %v42, 0.0
    %v402 = vadd.f32 %v400, %v401
    %v403 = vld [vmem:[%s2] sm:$0xff]
    %v404 = vld [vmem:[%s2 + $0x8] sm:$0xff]
    %v405 = vsel %vm43, %v395, 0.0
    %406 = vadd.xlane.f32.xlu0 %v405
    %v407 = vpop.xlane.xlu0 %406
    %v408 = vsel %vm43, %v402, 0.0
    %409 = vadd.xlane.f32.xlu0 %v408
    %v410 = vpop.xlane.xlu0 %409
    %v411 = vadd.f32 %v403, %v407
    %v412 = vadd.f32 %v404, %v410
    %vm413 = vcmask 7168
    %414 = vst.msk [vmem:[%s2] sm:$0xff] %vm413, %v411
    %415 = vst.msk [vmem:[%s2 + $0x8] sm:$0xff] %vm413, %v412
    // Predicated region
    $region14: #{tpu_custom_call.1} parent=1 // pred_check
      _
    $region15: #{tpu_custom_call.1} parent=1 // pred_check_branch
      %417 = sbr.rel (0) target = $region17
    $region16: #{tpu_custom_call.1} parent=1 // pred_region
      %s419 = ssub.s32 256, 256
      %420 = vsyncadd [#allocation4], %s419
      %s421 = sshll.u32 [#allocation5], 4
      %s422 = int_to_ptr.vmem [resolvable:$true] %s421
      %427 = dma.vmem_to_hbm [thread:$0]  %s422, 256, %s1, [#allocation4], 128, 128, 8
    $region17: #{tpu_custom_call.1} parent=1 // pred_fallthru
      _
    // Predicated region
    $region18: #{tpu_custom_call.1} parent=1 // pred_check
      _
    $region19: #{tpu_custom_call.1} parent=1 // pred_check_branch
      %429 = sbr.rel (0) target = $region21
    $region20: #{tpu_custom_call.1} parent=1 // pred_region
      _
    $region21: #{tpu_custom_call.1} parent=1 // pred_fallthru
      _
    // Predicated region
    $region22: #{tpu_custom_call.1} parent=1 // pred_check
      _
    $region23: #{tpu_custom_call.1} parent=1 // pred_check_branch
      %431 = sbr.rel (0) target = $region25
    $region24: #{tpu_custom_call.1} parent=1 // pred_region
      %432 = dma.done [#allocation4], 256
    $region25: #{tpu_custom_call.1} parent=1 // pred_fallthru
      _
    // Predicated region
    $region26: #{tpu_custom_call.1} parent=1 // pred_check
      _
    $region27: #{tpu_custom_call.1} parent=1 // pred_check_branch
      %434 = sbr.rel (0) target = $region29
    $region28: #{tpu_custom_call.1} parent=1 // pred_region
      _
    $region29: #{tpu_custom_call.1} parent=1 // pred_fallthru
      _
    %435 = vsyncpa [#allocation3], 1
    %436 = vsyncpa [#allocation4], 1

</llo_original>
